<compile_context>
chip_gen: v7x
topology: tpu7x:2x2x1
jax: 0.10.0
libtpu: 0.0.40
codegen_flags: <defaults>
</compile_context>

<pallas_src>
import jax
import jax.numpy as jnp
from jax import lax
from jax.experimental import pallas as pl
from jax.experimental.pallas import tpu as pltpu


def _lane_partial(x):
    """(TB, H, W) -> (1, W): reduce batch + sublane axes, keep the lane axis."""
    return jnp.sum(jnp.sum(x, axis=0), axis=0, keepdims=True)


def _ucert_partial_kernel(pred_ref, target_ref, rgb_ref, out_ref):
    """Per-lane partial sums for one batch block.  Output row-block (8, W):
      row 0: sum |target - pred| over valid pixels
      row 1: sum (target - pred)^2 over valid pixels
      row 2: count of valid pixels (target > 0)
      row 3: sum weights_x * |dx pred|
      row 4: sum weights_y * |dy pred|
      rows 5-7: zero padding (keeps the out block a full 8-sublane tile)
    """
    pred = pred_ref[...].astype(jnp.float32)      # (TB, H, W)
    target = target_ref[...].astype(jnp.float32)  # (TB, H, W)
    TB, H, W = pred.shape

    # ---- masked L1 / L2 partial sums (valid = target > 0) -------------------
    # where-selects instead of mask-multiplies / converts (VPU trim for v7x).
    valid = target > 0.0
    diff = jnp.where(valid, target - pred, 0.0)
    p_abs = _lane_partial(jnp.abs(diff))
    p_sq = _lane_partial(diff * diff)
    p_cnt = _lane_partial(jnp.where(valid, 1.0, 0.0))

    # ---- edge masks zeroing the roll wrap-around element --------------------
    # Built from tiny rolled iotas ((8,W) lane roll / (H,128) sublane roll) so
    # the mask matches whatever rotate-direction convention pltpu.roll uses,
    # at negligible XLU cost.  Assumes H >= 3 and W >= 3 (real images).
    col = lax.broadcasted_iota(jnp.int32, (8, W), 1)
    col_nbr = pltpu.roll(col, shift=W - 1, axis=1)
    mask_x = (jnp.abs(col_nbr - col) == 1)[0:1, :].reshape(1, 1, W)
    row = lax.broadcasted_iota(jnp.int32, (H, 128), 0)
    row_nbr = pltpu.roll(row, shift=H - 1, axis=0)
    mask_y = (jnp.abs(row_nbr - row) == 1)[:, 0:1].reshape(1, H, 1)

    # ---- edge-aware smoothness partial sums ----------------------------------
    pdx = jnp.where(mask_x, jnp.abs(pred - pltpu.roll(pred, shift=W - 1, axis=2)), 0.0)
    pdy = jnp.where(mask_y, jnp.abs(pred - pltpu.roll(pred, shift=H - 1, axis=1)), 0.0)

    # Unrolled channel loop: never materializes a (TB, 3, H, W) temporary.
    ch = rgb_ref[:, 0, :, :].astype(jnp.float32)               # (TB, H, W)
    sum_adx = jnp.abs(ch - pltpu.roll(ch, shift=W - 1, axis=2))
    sum_ady = jnp.abs(ch - pltpu.roll(ch, shift=H - 1, axis=1))
    for c in (1, 2):
        ch = rgb_ref[:, c, :, :].astype(jnp.float32)
        sum_adx = sum_adx + jnp.abs(ch - pltpu.roll(ch, shift=W - 1, axis=2))
        sum_ady = sum_ady + jnp.abs(ch - pltpu.roll(ch, shift=H - 1, axis=1))
    neg_third = jnp.float32(-1.0 / 3.0)
    wx = jnp.exp(sum_adx * neg_third)   # EUP
    wy = jnp.exp(sum_ady * neg_third)

    # Wrap positions contribute nothing: pdx/pdy are zero there.
    p_sx = _lane_partial(wx * pdx)
    p_sy = _lane_partial(wy * pdy)

    # Direct row stores (no sublane-concat relayout).
    out_ref[0, 0:1, :] = p_abs
    out_ref[0, 1:2, :] = p_sq
    out_ref[0, 2:3, :] = p_cnt
    out_ref[0, 3:4, :] = p_sx
    out_ref[0, 4:5, :] = p_sy
    out_ref[0, 5:8, :] = jnp.zeros((3, W), jnp.float32)


def _vmem_capacity_bytes():
    """Physical VMEM per core; conservative 64 MiB (v7x) fallback."""
    try:
        cap = int(getattr(pltpu.get_tpu_info(), "vmem_capacity_bytes", 0))
        if cap > 0:
            return cap
    except Exception:
        pass
    return 64 * 1024 * 1024


def ucert_re_loss_l11(pred, target, rgb, *, cast_rgb_bf16=False):
    """pred, target: (N, 1, H, W) float32; rgb: (N, 3, H, W) float32 (NCHW)."""
    N, C, H, W = pred.shape
    assert C == 1 and target.shape == pred.shape and rgb.shape == (N, 3, H, W)

    pred3 = pred.reshape(N, H, W).astype(jnp.float32)
    target3 = target.reshape(N, H, W).astype(jnp.float32)
    # Optional HBM-traffic trim for v5e/v6e (rgb only feeds exp(-mean|drgb|/3)
    # weights).  Default off: it perturbs the weights by ~1e-3 relative.
    rgb_in = rgb.astype(jnp.bfloat16) if cast_rgb_bf16 else rgb

    # ---- batch-block size -----------------------------------------------------
    # Pixel cap per grid step derived from physical VMEM (~capacity/4 budget at
    # ~96 B/px worst-case live footprint): ~175K px on 64 MiB (v7x), ~350K px on
    # 128 MiB (v5e/v6e).  Blocks >= ~1-2 MiB already sit near the HBM roofline,
    # so the modest cap costs nothing while leaving ample VMEM slack.
    cap = _vmem_capacity_bytes()
    px_cap = max((cap // 4) // 96, 4096)
    TB = max(1, px_cap // (H * W))
    if N >= 2:
        # Keep >= 2 grid steps so the "parallel" axis can shard across both
        # v7x TensorCores and the pipeline has steps to overlap.
        TB = min(TB, -(-N // 2))
    TB = min(TB, N)

    # Pad N to a multiple of TB (zero-padded images contribute exactly zero to
    # every partial sum); the true N stays in the denominators below.
    nb = -(-N // TB)
    n_pad = nb * TB - N
    if n_pad:
        pred3 = jnp.pad(pred3, ((0, n_pad), (0, 0), (0, 0)))
        target3 = jnp.pad(target3, ((0, n_pad), (0, 0), (0, 0)))
        rgb_in = jnp.pad(rgb_in, ((0, n_pad), (0, 0), (0, 0), (0, 0)))

    # Scoped-VMEM request sized from the real block footprint:
    # inputs 20 B/px double-buffered + ~56 B/px live temporaries, x1.5 slack,
    # clamped to <= 70% of physical VMEM (~ <=45 MiB on v7x, <=90 MiB on 128 MiB parts).
    block_px = TB * H * W
    est = block_px * 96 + (4 << 20)
    vmem_limit = int(min(int(cap * 0.70), max(int(est * 1.5), 24 << 20)))

    parts = pl.pallas_call(
        _ucert_partial_kernel,
        out_shape=jax.ShapeDtypeStruct((nb, 8, W), jnp.float32),
        grid=(nb,),
        in_specs=[
            pl.BlockSpec((TB, H, W), lambda b: (b, 0, 0)),
            pl.BlockSpec((TB, H, W), lambda b: (b, 0, 0)),
            pl.BlockSpec((TB, 3, H, W), lambda b: (b, 0, 0, 0)),
        ],
        out_specs=pl.BlockSpec((1, 8, W), lambda b: (b, 0, 0)),
        compiler_params=pltpu.CompilerParams(
            dimension_semantics=("parallel",),
            vmem_limit_bytes=vmem_limit,
        ),
    )(pred3, target3, rgb_in)

    # Final (tiny) cross-lane / cross-block reduction and scalar arithmetic.
    sums = jnp.sum(parts, axis=(0, 2))            # (8,)
    abs_sum, sq_sum, cnt = sums[0], sums[1], sums[2]
    sx_sum, sy_sum = sums[3], sums[4]
    l1 = abs_sum / cnt                            # NaN if no valid pixel, same as torch
    l2 = sq_sum / cnt
    smooth = sx_sum / float(N * H * (W - 1)) + sy_sum / float(N * (H - 1) * W)
    return l1 + l2 + 0.01 * smooth


def _reference_loss(pred, target, rgb):
    """Pure-JAX reference mirroring the PyTorch module."""
    mask = target > 0.0
    diff = jnp.where(mask, target - pred, 0.0)
    cnt = jnp.sum(mask.astype(jnp.float32))
    l1 = jnp.sum(jnp.abs(diff)) / cnt
    l2 = jnp.sum(diff * diff) / cnt
    pdx = pred[:, :, :, :-1] - pred[:, :, :, 1:]
    pdy = pred[:, :, :-1, :] - pred[:, :, 1:, :]
    idx = rgb[:, :, :, :-1] - rgb[:, :, :, 1:]
    idy = rgb[:, :, :-1, :] - rgb[:, :, 1:, :]
    wx = jnp.exp(-jnp.mean(jnp.abs(idx), axis=1, keepdims=True))
    wy = jnp.exp(-jnp.mean(jnp.abs(idy), axis=1, keepdims=True))
    smooth = jnp.mean(wx * jnp.abs(pdx)) + jnp.mean(wy * jnp.abs(pdy))
    return l1 + l2 + 0.01 * smooth


if __name__ == "__main__":
    N, H, W = 2, 16, 16
    key = jax.random.PRNGKey(0)
    k_pred, k_tgt, k_rgb = jax.random.split(key, 3)

    # pred: predicted depth-like map; target: sparse-ish positive map (mask
    # comes from target > 0); rgb: image in [0, 1].
    pred = jax.random.uniform(k_pred, (N, 1, H, W), jnp.float32, 0.0, 1.0)
    target = jax.random.uniform(k_tgt, (N, 1, H, W), jnp.float32, -0.5, 1.0)
    rgb = jax.random.uniform(k_rgb, (N, 3, H, W), jnp.float32, 0.0, 1.0)

    loss = jax.block_until_ready(ucert_re_loss_l11(pred, target, rgb))
    ref = jax.block_until_ready(_reference_loss(pred, target, rgb))

    assert jnp.isfinite(loss), f"non-finite loss: {loss}"
    assert jnp.allclose(loss, ref, rtol=1e-5, atol=1e-5), (loss, ref)
    print("KERNEL_OK")
</pallas_src>

<mosaic_0001>
module attributes {stable_mosaic.version = 11 : i64} {
  func.func @_ucert_partial_kernel(%arg0: i32, %arg1: memref<1x16x16xf32, #tpu.memory_space<vmem>>, %arg2: memref<1x16x16xf32, #tpu.memory_space<vmem>>, %arg3: memref<1x3x16x16xf32, #tpu.memory_space<vmem>>, %arg4: memref<1x8x16xf32, #tpu.memory_space<vmem>>) attributes {dimension_semantics = [#tpu.dimension_semantics<parallel>], iteration_bounds = array<i64: 2>, scalar_prefetch = 0 : i64, scratch_operands = 0 : i64, tpu.core_type = #tpu.core_type<tc>, window_params = [{transform_indices = @transform_0, window_bounds = array<i64: 1, 16, 16>}, {transform_indices = @transform_1, window_bounds = array<i64: 1, 16, 16>}, {transform_indices = @transform_2, window_bounds = array<i64: 1, 3, 16, 16>}, {transform_indices = @transform_3, window_bounds = array<i64: 1, 8, 16>}]} {
    %c0 = arith.constant 0 : index
    %c0_0 = arith.constant 0 : index
    %c0_1 = arith.constant 0 : index
    %0 = vector.load %arg1[%c0, %c0_0, %c0_1] : memref<1x16x16xf32, #tpu.memory_space<vmem>>, vector<1x16x16xf32>
    %c0_2 = arith.constant 0 : index
    %c0_3 = arith.constant 0 : index
    %c0_4 = arith.constant 0 : index
    %1 = vector.load %arg2[%c0_2, %c0_3, %c0_4] : memref<1x16x16xf32, #tpu.memory_space<vmem>>, vector<1x16x16xf32>
    %cst = arith.constant 0.000000e+00 : f32
    %2 = vector.broadcast %cst : f32 to vector<1x16x16xf32>
    %3 = arith.cmpf ogt, %1, %2 : vector<1x16x16xf32>
    %4 = arith.subf %1, %0 : vector<1x16x16xf32>
    %cst_5 = arith.constant 0.000000e+00 : f32
    %5 = vector.broadcast %cst_5 : f32 to vector<1x16x16xf32>
    %6 = arith.select %3, %4, %5 : vector<1x16x16xi1>, vector<1x16x16xf32>
    %7 = math.absf %6 : vector<1x16x16xf32>
    %cst_6 = arith.constant dense<0.000000e+00> : vector<16x16xf32>
    %8 = vector.multi_reduction <add>, %7, %cst_6 [0] : vector<1x16x16xf32> to vector<16x16xf32>
    %cst_7 = arith.constant dense<0.000000e+00> : vector<16xf32>
    %9 = vector.multi_reduction <add>, %8, %cst_7 [0] : vector<16x16xf32> to vector<16xf32>
    %10 = vector.shape_cast %9 : vector<16xf32> to vector<1x16xf32>
    %11 = arith.mulf %6, %6 : vector<1x16x16xf32>
    %cst_8 = arith.constant dense<0.000000e+00> : vector<16x16xf32>
    %12 = vector.multi_reduction <add>, %11, %cst_8 [0] : vector<1x16x16xf32> to vector<16x16xf32>
    %cst_9 = arith.constant dense<0.000000e+00> : vector<16xf32>
    %13 = vector.multi_reduction <add>, %12, %cst_9 [0] : vector<16x16xf32> to vector<16xf32>
    %14 = vector.shape_cast %13 : vector<16xf32> to vector<1x16xf32>
    %cst_10 = arith.constant 1.000000e+00 : f32
    %cst_11 = arith.constant 0.000000e+00 : f32
    %15 = vector.broadcast %cst_10 : f32 to vector<1x16x16xf32>
    %16 = vector.broadcast %cst_11 : f32 to vector<1x16x16xf32>
    %17 = arith.select %3, %15, %16 : vector<1x16x16xi1>, vector<1x16x16xf32>
    %cst_12 = arith.constant dense<0.000000e+00> : vector<16x16xf32>
    %18 = vector.multi_reduction <add>, %17, %cst_12 [0] : vector<1x16x16xf32> to vector<16x16xf32>
    %cst_13 = arith.constant dense<0.000000e+00> : vector<16xf32>
    %19 = vector.multi_reduction <add>, %18, %cst_13 [0] : vector<16x16xf32> to vector<16xf32>
    %20 = vector.shape_cast %19 : vector<16xf32> to vector<1x16xf32>
    %21 = tpu.iota {dimensions = array<i32: 1>} : vector<8x16xi32>
    %c15_i32 = arith.constant 15 : i32
    %22 = tpu.dynamic_rotate %21 by %c15_i32 dim 1 : vector<8x16xi32>, i32 -> vector<8x16xi32>
    %23 = arith.subi %22, %21 : vector<8x16xi32>
    %24 = math.absi %23 : vector<8x16xi32>
    %c1_i32 = arith.constant 1 : i32
    %25 = vector.broadcast %c1_i32 : i32 to vector<8x16xi32>
    %26 = arith.cmpi eq, %24, %25 : vector<8x16xi32>
    %27 = vector.extract_strided_slice %26 {offsets = [0, 0], sizes = [1, 16], strides = [1, 1]} : vector<8x16xi1> to vector<1x16xi1>
    %28 = vector.shape_cast %27 : vector<1x16xi1> to vector<1x1x16xi1>
    %29 = tpu.iota {dimensions = array<i32: 0>} : vector<16x128xi32>
    %c15_i32_14 = arith.constant 15 : i32
    %30 = tpu.dynamic_rotate %29 by %c15_i32_14 dim 0 : vector<16x128xi32>, i32 -> vector<16x128xi32>
    %31 = arith.subi %30, %29 : vector<16x128xi32>
    %32 = math.absi %31 : vector<16x128xi32>
    %c1_i32_15 = arith.constant 1 : i32
    %33 = vector.broadcast %c1_i32_15 : i32 to vector<16x128xi32>
    %34 = arith.cmpi eq, %32, %33 : vector<16x128xi32>
    %35 = vector.extract_strided_slice %34 {offsets = [0, 0], sizes = [16, 1], strides = [1, 1]} : vector<16x128xi1> to vector<16x1xi1>
    %36 = vector.shape_cast %35 : vector<16x1xi1> to vector<1x16x1xi1>
    %c15_i32_16 = arith.constant 15 : i32
    %37 = tpu.dynamic_rotate %0 by %c15_i32_16 dim 2 : vector<1x16x16xf32>, i32 -> vector<1x16x16xf32>
    %38 = arith.subf %0, %37 : vector<1x16x16xf32>
    %39 = math.absf %38 : vector<1x16x16xf32>
    %cst_17 = arith.constant 0.000000e+00 : f32
    %40 = vector.shape_cast %28 : vector<1x1x16xi1> to vector<1x1x16xi1>
    %41 = vector.broadcast %40 : vector<1x1x16xi1> to vector<1x16x16xi1>
    %42 = vector.broadcast %cst_17 : f32 to vector<1x16x16xf32>
    %43 = arith.select %41, %39, %42 : vector<1x16x16xi1>, vector<1x16x16xf32>
    %c15_i32_18 = arith.constant 15 : i32
    %44 = tpu.dynamic_rotate %0 by %c15_i32_18 dim 1 : vector<1x16x16xf32>, i32 -> vector<1x16x16xf32>
    %45 = arith.subf %0, %44 : vector<1x16x16xf32>
    %46 = math.absf %45 : vector<1x16x16xf32>
    %cst_19 = arith.constant 0.000000e+00 : f32
    %47 = vector.shape_cast %36 : vector<1x16x1xi1> to vector<1x16x1xi1>
    %48 = vector.broadcast %47 : vector<1x16x1xi1> to vector<1x16x16xi1>
    %49 = vector.broadcast %cst_19 : f32 to vector<1x16x16xf32>
    %50 = arith.select %48, %46, %49 : vector<1x16x16xi1>, vector<1x16x16xf32>
    %c0_20 = arith.constant 0 : index
    %c0_21 = arith.constant 0 : index
    %c0_22 = arith.constant 0 : index
    %c0_23 = arith.constant 0 : index
    %51 = vector.load %arg3[%c0_20, %c0_21, %c0_22, %c0_23] : memref<1x3x16x16xf32, #tpu.memory_space<vmem>>, vector<1x1x16x16xf32>
    %52 = vector.shape_cast %51 : vector<1x1x16x16xf32> to vector<1x16x16xf32>
    %c15_i32_24 = arith.constant 15 : i32
    %53 = tpu.dynamic_rotate %52 by %c15_i32_24 dim 2 : vector<1x16x16xf32>, i32 -> vector<1x16x16xf32>
    %54 = arith.subf %52, %53 : vector<1x16x16xf32>
    %55 = math.absf %54 : vector<1x16x16xf32>
    %c15_i32_25 = arith.constant 15 : i32
    %56 = tpu.dynamic_rotate %52 by %c15_i32_25 dim 1 : vector<1x16x16xf32>, i32 -> vector<1x16x16xf32>
    %57 = arith.subf %52, %56 : vector<1x16x16xf32>
    %58 = math.absf %57 : vector<1x16x16xf32>
    %c0_26 = arith.constant 0 : index
    %c1 = arith.constant 1 : index
    %c0_27 = arith.constant 0 : index
    %c0_28 = arith.constant 0 : index
    %59 = vector.load %arg3[%c0_26, %c1, %c0_27, %c0_28] : memref<1x3x16x16xf32, #tpu.memory_space<vmem>>, vector<1x1x16x16xf32>
    %60 = vector.shape_cast %59 : vector<1x1x16x16xf32> to vector<1x16x16xf32>
    %c15_i32_29 = arith.constant 15 : i32
    %61 = tpu.dynamic_rotate %60 by %c15_i32_29 dim 2 : vector<1x16x16xf32>, i32 -> vector<1x16x16xf32>
    %62 = arith.subf %60, %61 : vector<1x16x16xf32>
    %63 = math.absf %62 : vector<1x16x16xf32>
    %64 = arith.addf %55, %63 : vector<1x16x16xf32>
    %c15_i32_30 = arith.constant 15 : i32
    %65 = tpu.dynamic_rotate %60 by %c15_i32_30 dim 1 : vector<1x16x16xf32>, i32 -> vector<1x16x16xf32>
    %66 = arith.subf %60, %65 : vector<1x16x16xf32>
    %67 = math.absf %66 : vector<1x16x16xf32>
    %68 = arith.addf %58, %67 : vector<1x16x16xf32>
    %c0_31 = arith.constant 0 : index
    %c2 = arith.constant 2 : index
    %c0_32 = arith.constant 0 : index
    %c0_33 = arith.constant 0 : index
    %69 = vector.load %arg3[%c0_31, %c2, %c0_32, %c0_33] : memref<1x3x16x16xf32, #tpu.memory_space<vmem>>, vector<1x1x16x16xf32>
    %70 = vector.shape_cast %69 : vector<1x1x16x16xf32> to vector<1x16x16xf32>
    %c15_i32_34 = arith.constant 15 : i32
    %71 = tpu.dynamic_rotate %70 by %c15_i32_34 dim 2 : vector<1x16x16xf32>, i32 -> vector<1x16x16xf32>
    %72 = arith.subf %70, %71 : vector<1x16x16xf32>
    %73 = math.absf %72 : vector<1x16x16xf32>
    %74 = arith.addf %64, %73 : vector<1x16x16xf32>
    %c15_i32_35 = arith.constant 15 : i32
    %75 = tpu.dynamic_rotate %70 by %c15_i32_35 dim 1 : vector<1x16x16xf32>, i32 -> vector<1x16x16xf32>
    %76 = arith.subf %70, %75 : vector<1x16x16xf32>
    %77 = math.absf %76 : vector<1x16x16xf32>
    %78 = arith.addf %68, %77 : vector<1x16x16xf32>
    %cst_36 = arith.constant -0.333333343 : f32
    %79 = vector.broadcast %cst_36 : f32 to vector<1x16x16xf32>
    %80 = arith.mulf %74, %79 : vector<1x16x16xf32>
    %81 = math.exp %80 : vector<1x16x16xf32>
    %cst_37 = arith.constant -0.333333343 : f32
    %82 = vector.broadcast %cst_37 : f32 to vector<1x16x16xf32>
    %83 = arith.mulf %78, %82 : vector<1x16x16xf32>
    %84 = math.exp %83 : vector<1x16x16xf32>
    %85 = arith.mulf %81, %43 : vector<1x16x16xf32>
    %cst_38 = arith.constant dense<0.000000e+00> : vector<16x16xf32>
    %86 = vector.multi_reduction <add>, %85, %cst_38 [0] : vector<1x16x16xf32> to vector<16x16xf32>
    %cst_39 = arith.constant dense<0.000000e+00> : vector<16xf32>
    %87 = vector.multi_reduction <add>, %86, %cst_39 [0] : vector<16x16xf32> to vector<16xf32>
    %88 = vector.shape_cast %87 : vector<16xf32> to vector<1x16xf32>
    %89 = arith.mulf %84, %50 : vector<1x16x16xf32>
    %cst_40 = arith.constant dense<0.000000e+00> : vector<16x16xf32>
    %90 = vector.multi_reduction <add>, %89, %cst_40 [0] : vector<1x16x16xf32> to vector<16x16xf32>
    %cst_41 = arith.constant dense<0.000000e+00> : vector<16xf32>
    %91 = vector.multi_reduction <add>, %90, %cst_41 [0] : vector<16x16xf32> to vector<16xf32>
    %92 = vector.shape_cast %91 : vector<16xf32> to vector<1x16xf32>
    %c0_42 = arith.constant 0 : index
    %c0_43 = arith.constant 0 : index
    %c0_44 = arith.constant 0 : index
    %93 = vector.load %arg4[%c0_42, %c0_43, %c0_44] : memref<1x8x16xf32, #tpu.memory_space<vmem>>, vector<1x1x16xf32>
    %94 = vector.shape_cast %93 : vector<1x1x16xf32> to vector<1x16xf32>
    %95 = vector.shape_cast %10 : vector<1x16xf32> to vector<1x1x16xf32>
    tpu.vector_store %arg4[%c0_42, %c0_43, %c0_44], %95 {strides = array<i32>} : memref<1x8x16xf32, #tpu.memory_space<vmem>>, vector<1x1x16xf32>,
    %c0_45 = arith.constant 0 : index
    %c1_46 = arith.constant 1 : index
    %c0_47 = arith.constant 0 : index
    %96 = vector.load %arg4[%c0_45, %c1_46, %c0_47] : memref<1x8x16xf32, #tpu.memory_space<vmem>>, vector<1x1x16xf32>
    %97 = vector.shape_cast %96 : vector<1x1x16xf32> to vector<1x16xf32>
    %98 = vector.shape_cast %14 : vector<1x16xf32> to vector<1x1x16xf32>
    tpu.vector_store %arg4[%c0_45, %c1_46, %c0_47], %98 {strides = array<i32>} : memref<1x8x16xf32, #tpu.memory_space<vmem>>, vector<1x1x16xf32>,
    %c0_48 = arith.constant 0 : index
    %c2_49 = arith.constant 2 : index
    %c0_50 = arith.constant 0 : index
    %99 = vector.load %arg4[%c0_48, %c2_49, %c0_50] : memref<1x8x16xf32, #tpu.memory_space<vmem>>, vector<1x1x16xf32>
    %100 = vector.shape_cast %99 : vector<1x1x16xf32> to vector<1x16xf32>
    %101 = vector.shape_cast %20 : vector<1x16xf32> to vector<1x1x16xf32>
    tpu.vector_store %arg4[%c0_48, %c2_49, %c0_50], %101 {strides = array<i32>} : memref<1x8x16xf32, #tpu.memory_space<vmem>>, vector<1x1x16xf32>,
    %c0_51 = arith.constant 0 : index
    %c3 = arith.constant 3 : index
    %c0_52 = arith.constant 0 : index
    %102 = vector.load %arg4[%c0_51, %c3, %c0_52] : memref<1x8x16xf32, #tpu.memory_space<vmem>>, vector<1x1x16xf32>
    %103 = vector.shape_cast %102 : vector<1x1x16xf32> to vector<1x16xf32>
    %104 = vector.shape_cast %88 : vector<1x16xf32> to vector<1x1x16xf32>
    tpu.vector_store %arg4[%c0_51, %c3, %c0_52], %104 {strides = array<i32>} : memref<1x8x16xf32, #tpu.memory_space<vmem>>, vector<1x1x16xf32>,
    %c0_53 = arith.constant 0 : index
    %c4 = arith.constant 4 : index
    %c0_54 = arith.constant 0 : index
    %105 = vector.load %arg4[%c0_53, %c4, %c0_54] : memref<1x8x16xf32, #tpu.memory_space<vmem>>, vector<1x1x16xf32>
    %106 = vector.shape_cast %105 : vector<1x1x16xf32> to vector<1x16xf32>
    %107 = vector.shape_cast %92 : vector<1x16xf32> to vector<1x1x16xf32>
    tpu.vector_store %arg4[%c0_53, %c4, %c0_54], %107 {strides = array<i32>} : memref<1x8x16xf32, #tpu.memory_space<vmem>>, vector<1x1x16xf32>,
    %cst_55 = arith.constant 0.000000e+00 : f32
    %108 = vector.broadcast %cst_55 : f32 to vector<3x16xf32>
    %c0_56 = arith.constant 0 : index
    %c5 = arith.constant 5 : index
    %c0_57 = arith.constant 0 : index
    %109 = vector.load %arg4[%c0_56, %c5, %c0_57] : memref<1x8x16xf32, #tpu.memory_space<vmem>>, vector<1x3x16xf32>
    %110 = vector.shape_cast %109 : vector<1x3x16xf32> to vector<3x16xf32>
    %111 = vector.shape_cast %108 : vector<3x16xf32> to vector<1x3x16xf32>
    tpu.vector_store %arg4[%c0_56, %c5, %c0_57], %111 {strides = array<i32>} : memref<1x8x16xf32, #tpu.memory_space<vmem>>, vector<1x3x16xf32>,
    return
  }
  func.func @transform_0(%arg0: i32) -> (i32, i32, i32) {
    %c0_i32 = arith.constant 0 : i32
    %c0_i32_0 = arith.constant 0 : i32
    %c0_i32_1 = arith.constant 0 : i32
    return %arg0, %c0_i32, %c0_i32_0 : i32, i32, i32
  }
  func.func @transform_1(%arg0: i32) -> (i32, i32, i32) {
    %c0_i32 = arith.constant 0 : i32
    %c0_i32_0 = arith.constant 0 : i32
    %c0_i32_1 = arith.constant 0 : i32
    return %arg0, %c0_i32, %c0_i32_0 : i32, i32, i32
  }
  func.func @transform_2(%arg0: i32) -> (i32, i32, i32, i32) {
    %c0_i32 = arith.constant 0 : i32
    %c0_i32_0 = arith.constant 0 : i32
    %c0_i32_1 = arith.constant 0 : i32
    %c0_i32_2 = arith.constant 0 : i32
    return %arg0, %c0_i32, %c0_i32_0, %c0_i32_1 : i32, i32, i32, i32
  }
  func.func @transform_3(%arg0: i32) -> (i32, i32, i32) {
    %c0_i32 = arith.constant 0 : i32
    %c0_i32_0 = arith.constant 0 : i32
    %c0_i32_1 = arith.constant 0 : i32
    return %arg0, %c0_i32, %c0_i32_0 : i32, i32, i32
  }
}

</mosaic_0001>

<llo_original>
// kernel: tpu_custom_call.1
$region0: #{tpu_custom_call.1}
  #allocation0 [shape = 'u32[]', space=smem, size = 0x4, offset = 0x4, fixed_abs, tag = 'smem constant byte address 0x4 - core index']
  #allocation1 [shape = 'u32[144,128]{1,0:T(1,128)}', space=vmem, size = 0x12000, scoped, tag = 'internal scratch']
  %s0 = inlined_call_operand.hbm [shape: f32[2,16,16], index: 0, kind: input, shape index: {}]
  %s1 = inlined_call_operand.hbm [shape: f32[2,16,16], index: 1, kind: input, shape index: {}]
  %s2 = inlined_call_operand.hbm [shape: f32[2,3,16,16], index: 2, kind: input, shape index: {}]
  %s3 = inlined_call_operand.hbm [shape: f32[2,8,16], index: 3, kind: output, shape index: {}]
  %s4 = sld [smem:[#allocation0]]
  $region57: #{tpu_custom_call.1} parent=0
    _
  %s6 = ssub.s32 1, %s4
  %s7 = scalar_select 0, %s6, %s4
  $region1: #{tpu_custom_call.1} parent=0
    #allocation2 [shape = 'u8[16384]{0}', space=vmem, size = 0x4000, scoped, tag = 'input window, operand 0']
    #allocation3 [shape = 's32[2]{0}', space=sflag, size = 0x8, scoped, tag = 'scoped memory for tpu_custom_call.1']
    #allocation4 [shape = 's32[2]{0}', space=sflag, size = 0x8, scoped, tag = 'scoped memory for tpu_custom_call.1']
    #allocation5 [shape = 'u8[16384]{0}', space=vmem, size = 0x4000, scoped, tag = 'input window, operand 1']
    #allocation6 [shape = 's32[2]{0}', space=sflag, size = 0x8, scoped, tag = 'scoped memory for tpu_custom_call.1']
    #allocation7 [shape = 'u8[49152]{0}', space=vmem, size = 0xc000, scoped, tag = 'input window, operand 2']
    #allocation8 [shape = 'u8[8192]{0}', space=vmem, size = 0x2000, scoped, tag = 'output window, operand 0']
    %8 = vsyncpa [#allocation3], 0
    %s9 = scalar_lea.sflag [#allocation3], 1
    %10 = vsyncpa %s9, 0
    %11 = vsyncpa [#allocation6], 0
    %s12 = scalar_lea.sflag [#allocation6], 1
    %13 = vsyncpa %s12, 0
    %14 = vsyncpa [#allocation4], 0
    %s15 = scalar_lea.sflag [#allocation4], 1
    %16 = vsyncpa %s15, 0
    loop: start=0, step=1, limit=4
    $region2: #{tpu_custom_call.1} parent=1 // loop_pre_header
      _
    $region3: #{tpu_custom_call.1} parent=1 // loop_header
      %s18 = sphi 0, %s22
      %p19 = scmp.ge.s32.totalorder %s18, 4
      %s28 = sphi 0, %s30
      %s31 = sphi 0, %s28
      %s32 = sphi 0, %s31
      %s48 = sphi 0, %s32
      %s54 = sphi 0, %s56
      %s57 = sphi 0, %s54
      %s58 = sphi 0, %s57
      %s74 = sphi 0, %s58
      %s80 = sphi 0, %s82
      %s83 = sphi 0, %s80
      %s84 = sphi 0, %s83
      %s100 = sphi 0, %s84
      %s106 = sphi 0, %s108
      %s109 = sphi 0, %s106
      %s110 = sphi 0, %s109
      %s126 = sphi 0, %s110
    $region4: #{tpu_custom_call.1} parent=1 // loop_header_branch
      %21 = sbr.rel (%p19) target = $region8
    $region5: #{tpu_custom_call.1} parent=1 // loop_body
      %s23 = ssub.s32 %s18, 1
      %s24 = ssub.s32 %s18, 2
      %s25 = sadd.s32 %s18, 1
      %s26 = ssub.s32 %s18, %s25
      %p27 = scmp.eq.s32.totalorder %s26, 0
      %s29 = sadd.s32 %s28, 1
      %s30 = scalar_select %p27, %s28, %s29
      %p33 = pneg %p27
      %p34 = scmp.eq.s32.totalorder %s18, 1
      %p35 = por %p33, %p34
      %p36 = scmp.ne.s32.totalorder %s28, %s31
      %p37 = scmp.eq.s32.totalorder %s18, 0
      %p38 = por %p36, %p37
      %p39 = scmp.ne.s32.totalorder %s28, %s31
      %p40 = scmp.eq.s32.totalorder %s23, 1
      %p41 = por %p39, %p40
      %p42 = scmp.ne.s32.totalorder %s31, %s32
      %p43 = scmp.eq.s32.totalorder %s23, 0
      %p44 = por %p42, %p43
      %p45 = scmp.ne.s32.totalorder %s31, %s32
      %p46 = scmp.eq.s32.totalorder %s24, 1
      %p47 = por %p45, %p46
      %p49 = scmp.ne.s32.totalorder %s32, %s48
      %p50 = scmp.eq.s32.totalorder %s24, 0
      %p51 = por %p49, %p50
      %s52 = ssub.s32 %s18, %s25
      %p53 = scmp.eq.s32.totalorder %s52, 0
      %s55 = sadd.s32 %s54, 1
      %s56 = scalar_select %p53, %s54, %s55
      %p59 = pneg %p53
      %p60 = scmp.eq.s32.totalorder %s18, 1
      %p61 = por %p59, %p60
      %p62 = scmp.ne.s32.totalorder %s54, %s57
      %p63 = scmp.eq.s32.totalorder %s18, 0
      %p64 = por %p62, %p63
      %p65 = scmp.ne.s32.totalorder %s54, %s57
      %p66 = scmp.eq.s32.totalorder %s23, 1
      %p67 = por %p65, %p66
      %p68 = scmp.ne.s32.totalorder %s57, %s58
      %p69 = scmp.eq.s32.totalorder %s23, 0
      %p70 = por %p68, %p69
      %p71 = scmp.ne.s32.totalorder %s57, %s58
      %p72 = scmp.eq.s32.totalorder %s24, 1
      %p73 = por %p71, %p72
      %p75 = scmp.ne.s32.totalorder %s58, %s74
      %p76 = scmp.eq.s32.totalorder %s24, 0
      %p77 = por %p75, %p76
      %s78 = ssub.s32 %s18, %s25
      %p79 = scmp.eq.s32.totalorder %s78, 0
      %s81 = sadd.s32 %s80, 1
      %s82 = scalar_select %p79, %s80, %s81
      %p85 = pneg %p79
      %p86 = scmp.eq.s32.totalorder %s18, 1
      %p87 = por %p85, %p86
      %p88 = scmp.ne.s32.totalorder %s80, %s83
      %p89 = scmp.eq.s32.totalorder %s18, 0
      %p90 = por %p88, %p89
      %p91 = scmp.ne.s32.totalorder %s80, %s83
      %p92 = scmp.eq.s32.totalorder %s23, 1
      %p93 = por %p91, %p92
      %p94 = scmp.ne.s32.totalorder %s83, %s84
      %p95 = scmp.eq.s32.totalorder %s23, 0
      %p96 = por %p94, %p95
      %p97 = scmp.ne.s32.totalorder %s83, %s84
      %p98 = scmp.eq.s32.totalorder %s24, 1
      %p99 = por %p97, %p98
      %p101 = scmp.ne.s32.totalorder %s84, %s100
      %p102 = scmp.eq.s32.totalorder %s24, 0
      %p103 = por %p101, %p102
      %s104 = ssub.s32 %s18, %s25
      %p105 = scmp.eq.s32.totalorder %s104, 0
      %s107 = sadd.s32 %s106, 1
      %s108 = scalar_select %p105, %s106, %s107
      %p111 = pneg %p105
      %p112 = scmp.eq.s32.totalorder %s18, 1
      %p113 = por %p111, %p112
      %p114 = scmp.ne.s32.totalorder %s106, %s109
      %p115 = scmp.eq.s32.totalorder %s18, 0
      %p116 = por %p114, %p115
      %p117 = scmp.ne.s32.totalorder %s106, %s109
      %p118 = scmp.eq.s32.totalorder %s23, 1
      %p119 = por %p117, %p118
      %p120 = scmp.ne.s32.totalorder %s109, %s110
      %p121 = scmp.eq.s32.totalorder %s23, 0
      %p122 = por %p120, %p121
      %p123 = scmp.ne.s32.totalorder %s109, %s110
      %p124 = scmp.eq.s32.totalorder %s24, 1
      %p125 = por %p123, %p124
      %p127 = scmp.ne.s32.totalorder %s110, %s126
      %p128 = scmp.eq.s32.totalorder %s24, 0
      %p129 = por %p127, %p128
      %p130 = scmp.le.s32.totalorder 1, %s18
      %p131 = scmp.lt.s32.totalorder %s18, 3
      %p132 = pnand %p130, %p131
      %p133 = pneg %p132
      // Predicated region
      $region9: #{tpu_custom_call.1} parent=5 // pred_check
        _
      $region10: #{tpu_custom_call.1} parent=5 // pred_check_branch
        %135 = sbr.rel (%p132) target = $region12
      $region11: #{tpu_custom_call.1} parent=5 // pred_region
        %s136 = ssub.s32 %s18, 1
      $region12: #{tpu_custom_call.1} parent=5 // pred_fallthru
        _
      %p137 = scmp.lt.s32.totalorder %s18, 2
      // Predicated region
      $region13: #{tpu_custom_call.1} parent=5 // pred_check
        %p138 = pneg %p137
      $region14: #{tpu_custom_call.1} parent=5 // pred_check_branch
        %140 = sbr.rel (%p138) target = $region16
      $region15: #{tpu_custom_call.1} parent=5 // pred_region
        // Predicated region
        $region17: #{tpu_custom_call.1} parent=15 // pred_check
          %p141 = pneg %p38
        $region18: #{tpu_custom_call.1} parent=15 // pred_check_branch
          %143 = sbr.rel (%p141) target = $region20
        $region19: #{tpu_custom_call.1} parent=15 // pred_region
          %s144 = sand.u32 %s28, 1
          %s145 = scalar_lea.sflag [#allocation3], %s144
          %s146 = sand.u32 %s28, 1
          %s147 = smul.addr %s146, 16
          %s148 = scalar_lea.vmem [#allocation2], %s147
          %s150 = ssub.s32 256, 256
          %151 = vsyncadd %s145, %s150
          %s152 = smul.addr %s18, 2
          %s153 = smul.addr %s152, 128
          %s154 = scalar_lea.hbm %s0, %s153
          %s155 = sshll.u32 %s148, 4
          %s156 = int_to_ptr.vmem [resolvable:$true] %s155
          %161 = dma.hbm_to_vmem [thread:$0]  %s154, 256, %s156, %s145, 128, 128, 8
        $region20: #{tpu_custom_call.1} parent=15 // pred_fallthru
          _
        // Predicated region
        $region21: #{tpu_custom_call.1} parent=15 // pred_check
          %p162 = pneg %p64
        $region22: #{tpu_custom_call.1} parent=15 // pred_check_branch
          %164 = sbr.rel (%p162) target = $region24
        $region23: #{tpu_custom_call.1} parent=15 // pred_region
          %s165 = sand.u32 %s18, 1
          %s166 = scalar_lea.sflag [#allocation6], %s165
          %s167 = sand.u32 %s54, 1
          %s168 = smul.addr %s167, 16
          %s169 = scalar_lea.vmem [#allocation5], %s168
          %s171 = ssub.s32 256, 256
          %172 = vsyncadd %s166, %s171
          %s173 = smul.addr %s18, 2
          %s174 = smul.addr %s173, 128
          %s175 = scalar_lea.hbm %s1, %s174
          %s176 = sshll.u32 %s169, 4
          %s177 = int_to_ptr.vmem [resolvable:$true] %s176
          %182 = dma.hbm_to_vmem [thread:$0]  %s175, 256, %s177, %s166, 128, 128, 8
        $region24: #{tpu_custom_call.1} parent=15 // pred_fallthru
          _
        // Predicated region
        $region25: #{tpu_custom_call.1} parent=15 // pred_check
          %p183 = pneg %p90
        $region26: #{tpu_custom_call.1} parent=15 // pred_check_branch
          %185 = sbr.rel (%p183) target = $region28
        $region27: #{tpu_custom_call.1} parent=15 // pred_region
          %s186 = sand.u32 %s18, 1
          %s187 = scalar_lea.sflag [#allocation6], %s186
          %s188 = sand.u32 %s80, 1
          %s189 = smul.addr %s188, 48
          %s190 = scalar_lea.vmem [#allocation7], %s189
          %s192 = ssub.s32 768, 768
          %193 = vsyncadd %s187, %s192
          %s194 = smul.addr %s18, 6
          %s195 = smul.addr %s194, 128
          %s196 = scalar_lea.hbm %s2, %s195
          %s197 = sshll.u32 %s190, 4
          %s198 = int_to_ptr.vmem [resolvable:$true] %s197
          %203 = dma.hbm_to_vmem [thread:$0]  %s196, 768, %s198, %s187, 128, 128, 8
        $region28: #{tpu_custom_call.1} parent=15 // pred_fallthru
          _
      $region16: #{tpu_custom_call.1} parent=5 // pred_fallthru
        _
      %p204 = scmp.le.s32.totalorder 1, %s18
      %p205 = scmp.lt.s32.totalorder %s18, 3
      %p206 = pnand %p204, %p205
      %p207 = pneg %p206
      // Predicated region
      $region29: #{tpu_custom_call.1} parent=5 // pred_check
        _
      $region30: #{tpu_custom_call.1} parent=5 // pred_check_branch
        %209 = sbr.rel (%p206) target = $region32
      $region31: #{tpu_custom_call.1} parent=5 // pred_region
        %s210 = ssub.s32 %s18, 1
        %s211 = sand.u32 %s31, 1
        %s212 = scalar_lea.sflag [#allocation3], %s211
        %s213 = sand.u32 %s31, 1
        %s214 = smul.addr %s213, 16
        %s215 = scalar_lea.vmem [#allocation2], %s214
        // Predicated region
        $region33: #{tpu_custom_call.1} parent=31 // pred_check
          %p216 = pneg %p44
        $region34: #{tpu_custom_call.1} parent=31 // pred_check_branch
          %218 = sbr.rel (%p216) target = $region36
        $region35: #{tpu_custom_call.1} parent=31 // pred_region
          %219 = dma.done %s212, 256
        $region36: #{tpu_custom_call.1} parent=31 // pred_fallthru
          _
        %s220 = sand.u32 %s23, 1
        %s221 = scalar_lea.sflag [#allocation6], %s220
        %s222 = sand.u32 %s57, 1
        %s223 = smul.addr %s222, 16
        %s224 = scalar_lea.vmem [#allocation5], %s223
        // Predicated region
        $region37: #{tpu_custom_call.1} parent=31 // pred_check
          %p225 = pneg %p70
        $region38: #{tpu_custom_call.1} parent=31 // pred_check_branch
          %227 = sbr.rel (%p225) target = $region40
        $region39: #{tpu_custom_call.1} parent=31 // pred_region
          %228 = dma.done %s221, 256
        $region40: #{tpu_custom_call.1} parent=31 // pred_fallthru
          _
        %s229 = sand.u32 %s23, 1
        %s230 = scalar_lea.sflag [#allocation6], %s229
        %s231 = sand.u32 %s83, 1
        %s232 = smul.addr %s231, 48
        %s233 = scalar_lea.vmem [#allocation7], %s232
        // Predicated region
        $region41: #{tpu_custom_call.1} parent=31 // pred_check
          %p234 = pneg %p96
        $region42: #{tpu_custom_call.1} parent=31 // pred_check_branch
          %236 = sbr.rel (%p234) target = $region44
        $region43: #{tpu_custom_call.1} parent=31 // pred_region
          %237 = dma.done %s230, 768
        $region44: #{tpu_custom_call.1} parent=31 // pred_fallthru
          _
        %s238 = sand.u32 %s31, 1
        %s239 = scalar_lea.sflag [#allocation3], %s238
        %s240 = sand.u32 %s31, 1
        %s241 = smul.addr %s240, 16
        %s242 = scalar_lea.vmem [#allocation2], %s241
        %p243 = pneg %p44
        %p244 = pneg %p41
        %s245 = sand.u32 %s23, 1
        %s246 = scalar_lea.sflag [#allocation6], %s245
        %s247 = sand.u32 %s57, 1
        %s248 = smul.addr %s247, 16
        %s249 = scalar_lea.vmem [#allocation5], %s248
        %p250 = pneg %p70
        %p251 = pneg %p67
        %s252 = sand.u32 %s23, 1
        %s253 = scalar_lea.sflag [#allocation6], %s252
        %s254 = sand.u32 %s83, 1
        %s255 = smul.addr %s254, 48
        %s256 = scalar_lea.vmem [#allocation7], %s255
        %p257 = pneg %p96
        %p258 = pneg %p93
        %p259 = pneg %p122
        %p260 = pneg %p119
        %s261 = sand.u32 %s109, 1
        %s262 = scalar_lea.sflag [#allocation4], %s261
        %s263 = sand.u32 %s109, 1
        %s264 = smul.addr %s263, 8
        %s265 = scalar_lea.vmem [#allocation8], %s264
        %v266 = vld [vmem:[%s215] sm:$0xff]
        %v267 = vld [vmem:[%s215 + $0x8] sm:$0xff]
        %v268 = vld [vmem:[%s224] sm:$0xff]
        %v269 = vld [vmem:[%s224 + $0x8] sm:$0xff]
        %vm270 = vcmp.gt.f32.partialorder %v268, 0.0
        %vm271 = vcmp.gt.f32.partialorder %v269, 0.0
        %v272 = vsub.f32 %v268, %v266
        %v273 = vsub.f32 %v269, %v267
        %v274 = vsel %vm270, %v272, 0.0
        %v275 = vsel %vm271, %v273, 0.0
        %v276 = vand.u32 2147483647, %v274
        %v277 = vand.u32 2147483647, %v275
        %v278 = vadd.f32 %v276, 0.0
        %v279 = vadd.f32 %v277, 0.0
        %vm280 = vcmask 130048
        %v281 = vsel %vm280, %v278, 0.0
        %v282 = vsel %vm280, %v279, 0.0
        %v283 = vadd.f32 %v281, %v282
        %v284 = vrot.slane %v283, 4
        %v285 = vadd.f32 %v283, %v284
        %v286 = vrot.slane %v285, 2
        %v287 = vadd.f32 %v285, %v286
        %v288 = vrot.slane %v287, 1
        %v289 = vadd.f32 %v287, %v288
        %v290 = vmul.f32 %v274, %v274
        %v291 = vmul.f32 %v275, %v275
        %v292 = vadd.f32 %v290, 0.0
        %v293 = vadd.f32 %v291, 0.0
        %v294 = vsel %vm280, %v292, 0.0
        %v295 = vsel %vm280, %v293, 0.0
        %v296 = vadd.f32 %v294, %v295
        %v297 = vrot.slane %v296, 4
        %v298 = vadd.f32 %v296, %v297
        %v299 = vrot.slane %v298, 2
        %v300 = vadd.f32 %v298, %v299
        %v301 = vrot.slane %v300, 1
        %v302 = vadd.f32 %v300, %v301
        %v303 = vsel %vm270, 1.0, 0.0
        %v304 = vsel %vm271, 1.0, 0.0
        %v305 = vadd.f32 %v303, 0.0
        %v306 = vadd.f32 %v304, 0.0
        %v307 = vsel %vm280, %v305, 0.0
        %v308 = vsel %vm280, %v306, 0.0
        %v309 = vadd.f32 %v307, %v308
        %v310 = vrot.slane %v309, 4
        %v311 = vadd.f32 %v309, %v310
        %v312 = vrot.slane %v311, 2
        %v313 = vadd.f32 %v311, %v312
        %v314 = vrot.slane %v313, 1
        %v315 = vadd.f32 %v313, %v314
        %v316 = vlaneseq
        %v317 = vand.u32 %v316, 127
        %vm318 = vcmask 1047680
        %319 = vrot.lane.b32.xlu0 %v317, 16
        %v320 = vpop.permute.xlu0 %319
        %v321 = vsel %vm318, %v320, %v317
        %322 = vrot.lane.b32.xlu0 %v321, 16
        %v323 = vpop.permute.xlu0 %322
        %v324 = vsel %vm318, %v323, %v317
        %325 = vrot.lane.b32.xlu0 %v317, 1
        %v326 = vpop.permute.xlu0 %325
        %v327 = vsub.s32 %v324, %v326
        %vm328 = vcmp.lt.s32.totalorder %v327, 0
        %v329 = vsub.s32 0, %v327
        %v330 = vsel %vm328, %v329, %v327
        %vm331 = vcmp.eq.s32.totalorder %v330, 1
        %v332 = vlaneseq
        %v333 = vshrl.u32 %v332, 7
        %v334 = vadd.s32 %v333, 8
        %v335 = vrot.slane %v333, 1
        %v336 = vrot.slane %v334, 1
        %vm337 = vcmp.lt.s32.totalorder %v333, 7
        %v338 = vsel %vm337, %v335, %v336
        %v339 = vsel %vm337, %v336, %v335
        %v340 = vsub.s32 %v338, %v333
        %v341 = vsub.s32 %v339, %v334
        %vm342 = vcmp.lt.s32.totalorder %v340, 0
        %v343 = vsub.s32 0, %v340
        %v344 = vsel %vm342, %v343, %v340
        %vm345 = vcmp.lt.s32.totalorder %v341, 0
        %v346 = vsub.s32 0, %v341
        %v347 = vsel %vm345, %v346, %v341
        %vm348 = vcmp.eq.s32.totalorder %v344, 1
        %vm349 = vcmp.eq.s32.totalorder %v347, 1
        %350 = vrot.lane.b32.xlu0 %v266, 16
        %v351 = vpop.permute.xlu0 %350
        %v352 = vsel %vm318, %v351, %v266
        %353 = vrot.lane.b32.xlu0 %v267, 16
        %v354 = vpop.permute.xlu0 %353
        %v355 = vsel %vm318, %v354, %v267
        %356 = vrot.lane.b32.xlu0 %v352, 16
        %v357 = vpop.permute.xlu0 %356
        %358 = vrot.lane.b32.xlu0 %v355, 16
        %v359 = vpop.permute.xlu0 %358
        %v360 = vsel %vm318, %v357, %v266
        %v361 = vsel %vm318, %v359, %v267
        %364 = vrot.lane.b32.xlu0 %v360, 127
        %v365 = vpop.permute.xlu0 %364
        %366 = vrot.lane.b32.xlu0 %v361, 127
        %v367 = vpop.permute.xlu0 %366
        %v370 = vsub.f32 %v266, %v365
        %v371 = vsub.f32 %v267, %v367
        %v372 = vand.u32 2147483647, %v370
        %v373 = vand.u32 2147483647, %v371
        %v374 = vsel %vm331, 1, 0
        %vm375 = vcmp.eq.s32.totalorder %v374, 1
        %v378 = vrot.slane %v372, 1
        %v379 = vrot.slane %v372, 2
        %v380 = vrot.slane %v372, 3
        %v381 = vrot.slane %v372, 4
        %v382 = vrot.slane %v372, 5
        %v383 = vrot.slane %v372, 6
        %v384 = vrot.slane %v372, 7
        %v385 = vrot.slane %v373, 1
        %v386 = vrot.slane %v373, 2
        %v387 = vrot.slane %v373, 3
        %v388 = vrot.slane %v373, 4
        %v389 = vrot.slane %v373, 5
        %v390 = vrot.slane %v373, 6
        %v391 = vrot.slane %v373, 7
        %392 = vrot.lane.b32.xlu0 %v372, 1
        %v393 = vpop.permute.xlu0 %392
        %394 = vrot.lane.b32.xlu0 %v378, 1
        %v395 = vpop.permute.xlu0 %394
        %396 = vrot.lane.b32.xlu0 %v379, 1
        %v397 = vpop.permute.xlu0 %396
        %398 = vrot.lane.b32.xlu0 %v380, 1
        %v399 = vpop.permute.xlu0 %398
        %400 = vrot.lane.b32.xlu0 %v381, 1
        %v401 = vpop.permute.xlu0 %400
        %402 = vrot.lane.b32.xlu0 %v382, 1
        %v403 = vpop.permute.xlu0 %402
        %404 = vrot.lane.b32.xlu0 %v383, 1
        %v405 = vpop.permute.xlu0 %404
        %406 = vrot.lane.b32.xlu0 %v384, 1
        %v407 = vpop.permute.xlu0 %406
        %408 = vrot.lane.b32.xlu0 %v373, 1
        %v409 = vpop.permute.xlu0 %408
        %410 = vrot.lane.b32.xlu0 %v385, 1
        %v411 = vpop.permute.xlu0 %410
        %412 = vrot.lane.b32.xlu0 %v386, 1
        %v413 = vpop.permute.xlu0 %412
        %414 = vrot.lane.b32.xlu0 %v387, 1
        %v415 = vpop.permute.xlu0 %414
        %416 = vrot.lane.b32.xlu0 %v388, 1
        %v417 = vpop.permute.xlu0 %416
        %418 = vrot.lane.b32.xlu0 %v389, 1
        %v419 = vpop.permute.xlu0 %418
        %420 = vrot.lane.b32.xlu0 %v390, 1
        %v421 = vpop.permute.xlu0 %420
        %422 = vrot.lane.b32.xlu0 %v391, 1
        %v423 = vpop.permute.xlu0 %422
        %v440 = vsel %vm375, %v393, 0.0
        %v441 = vsel %vm375, %v395, 0.0
        %v442 = vsel %vm375, %v397, 0.0
        %v443 = vsel %vm375, %v399, 0.0
        %v444 = vsel %vm375, %v401, 0.0
        %v445 = vsel %vm375, %v403, 0.0
        %v446 = vsel %vm375, %v405, 0.0
        %v447 = vsel %vm375, %v407, 0.0
        %v448 = vsel %vm375, %v409, 0.0
        %v449 = vsel %vm375, %v411, 0.0
        %v450 = vsel %vm375, %v413, 0.0
        %v451 = vsel %vm375, %v415, 0.0
        %v452 = vsel %vm375, %v417, 0.0
        %v453 = vsel %vm375, %v419, 0.0
        %v454 = vsel %vm375, %v421, 0.0
        %v455 = vsel %vm375, %v423, 0.0
        %v456 = vrot.slane %v266, 1
        %v457 = vrot.slane %v267, 1
        %v458 = vsel %vm337, %v456, %v457
        %v459 = vsel %vm337, %v457, %v456
        %v460 = vsub.f32 %v266, %v458
        %v461 = vsub.f32 %v267, %v459
        %v462 = vand.u32 2147483647, %v460
        %v463 = vand.u32 2147483647, %v461
        %v464 = vsel %vm348, 1, 0
        %v465 = vsel %vm349, 1, 0
        %466 = vset.pattern.permute.xlu0 0
        %467 = vperm.xlu0 %466, %v464
        %v468 = vpop.permute.xlu0 %467
        %469 = vset.pattern.permute.xlu0 0
        %470 = vperm.xlu0 %469, %v465
        %v471 = vpop.permute.xlu0 %470
        %vm472 = vcmp.eq.s32.totalorder %v468, 1
        %vm473 = vcmp.eq.s32.totalorder %v471, 1
        %v474 = vsel %vm472, %v462, 0.0
        %v475 = vsel %vm473, %v463, 0.0
        %v476 = vld [vmem:[%s233] sm:$0xff]
        %v477 = vld [vmem:[%s233 + $0x8] sm:$0xff]
        %478 = vrot.lane.b32.xlu0 %v476, 16
        %v479 = vpop.permute.xlu0 %478
        %v480 = vsel %vm318, %v479, %v476
        %481 = vrot.lane.b32.xlu0 %v477, 16
        %v482 = vpop.permute.xlu0 %481
        %v483 = vsel %vm318, %v482, %v477
        %484 = vrot.lane.b32.xlu0 %v480, 16
        %v485 = vpop.permute.xlu0 %484
        %486 = vrot.lane.b32.xlu0 %v483, 16
        %v487 = vpop.permute.xlu0 %486
        %v488 = vsel %vm318, %v485, %v476
        %v489 = vsel %vm318, %v487, %v477
        %492 = vrot.lane.b32.xlu0 %v488, 127
        %v493 = vpop.permute.xlu0 %492
        %494 = vrot.lane.b32.xlu0 %v489, 127
        %v495 = vpop.permute.xlu0 %494
        %v498 = vsub.f32 %v476, %v493
        %v499 = vsub.f32 %v477, %v495
        %v500 = vand.u32 2147483647, %v498
        %v501 = vand.u32 2147483647, %v499
        %v502 = vrot.slane %v476, 1
        %v503 = vrot.slane %v477, 1
        %v504 = vsel %vm337, %v502, %v503
        %v505 = vsel %vm337, %v503, %v502
        %v506 = vsub.f32 %v476, %v504
        %v507 = vsub.f32 %v477, %v505
        %v508 = vand.u32 2147483647, %v506
        %v509 = vand.u32 2147483647, %v507
        %s510 = scalar_lea.vmem %s233, 16 [#allocation7]
        %v511 = vld [vmem:[%s510] sm:$0xff]
        %v512 = vld [vmem:[%s510 + $0x8] sm:$0xff]
        %513 = vrot.lane.b32.xlu0 %v511, 16
        %v514 = vpop.permute.xlu0 %513
        %v515 = vsel %vm318, %v514, %v511
        %516 = vrot.lane.b32.xlu0 %v512, 16
        %v517 = vpop.permute.xlu0 %516
        %v518 = vsel %vm318, %v517, %v512
        %519 = vrot.lane.b32.xlu0 %v515, 16
        %v520 = vpop.permute.xlu0 %519
        %521 = vrot.lane.b32.xlu0 %v518, 16
        %v522 = vpop.permute.xlu0 %521
        %v523 = vsel %vm318, %v520, %v511
        %v524 = vsel %vm318, %v522, %v512
        %527 = vrot.lane.b32.xlu0 %v523, 127
        %v528 = vpop.permute.xlu0 %527
        %529 = vrot.lane.b32.xlu0 %v524, 127
        %v530 = vpop.permute.xlu0 %529
        %v533 = vsub.f32 %v511, %v528
        %v534 = vsub.f32 %v512, %v530
        %v535 = vand.u32 2147483647, %v533
        %v536 = vand.u32 2147483647, %v534
        %v537 = vadd.f32 %v500, %v535
        %v538 = vadd.f32 %v501, %v536
        %v539 = vrot.slane %v511, 1
        %v540 = vrot.slane %v512, 1
        %v541 = vsel %vm337, %v539, %v540
        %v542 = vsel %vm337, %v540, %v539
        %v543 = vsub.f32 %v511, %v541
        %v544 = vsub.f32 %v512, %v542
        %v545 = vand.u32 2147483647, %v543
        %v546 = vand.u32 2147483647, %v544
        %v547 = vadd.f32 %v508, %v545
        %v548 = vadd.f32 %v509, %v546
        %s549 = scalar_lea.vmem %s233, 32 [#allocation7]
        %v550 = vld [vmem:[%s549] sm:$0xff]
        %v551 = vld [vmem:[%s549 + $0x8] sm:$0xff]
        %552 = vrot.lane.b32.xlu0 %v550, 16
        %v553 = vpop.permute.xlu0 %552
        %v554 = vsel %vm318, %v553, %v550
        %555 = vrot.lane.b32.xlu0 %v551, 16
        %v556 = vpop.permute.xlu0 %555
        %v557 = vsel %vm318, %v556, %v551
        %558 = vrot.lane.b32.xlu0 %v554, 16
        %v559 = vpop.permute.xlu0 %558
        %560 = vrot.lane.b32.xlu0 %v557, 16
        %v561 = vpop.permute.xlu0 %560
        %v562 = vsel %vm318, %v559, %v550
        %v563 = vsel %vm318, %v561, %v551
        %566 = vrot.lane.b32.xlu0 %v562, 127
        %v567 = vpop.permute.xlu0 %566
        %568 = vrot.lane.b32.xlu0 %v563, 127
        %v569 = vpop.permute.xlu0 %568
        %v572 = vsub.f32 %v550, %v567
        %v573 = vsub.f32 %v551, %v569
        %v574 = vand.u32 2147483647, %v572
        %v575 = vand.u32 2147483647, %v573
        %v576 = vadd.f32 %v537, %v574
        %v577 = vadd.f32 %v538, %v575
        %v578 = vrot.slane %v550, 1
        %v579 = vrot.slane %v551, 1
        %v580 = vsel %vm337, %v578, %v579
        %v581 = vsel %vm337, %v579, %v578
        %v582 = vsub.f32 %v550, %v580
        %v583 = vsub.f32 %v551, %v581
        %v584 = vand.u32 2147483647, %v582
        %v585 = vand.u32 2147483647, %v583
        %v586 = vadd.f32 %v547, %v584
        %v587 = vadd.f32 %v548, %v585
        %v588 = vmul.f32 %v576, -0.33333334
        %v589 = vmul.f32 %v577, -0.33333334
        %v590 = vmul.f32 %v588, 1.442695
        %v591 = vpow.pop %v590
        %v592 = vmul.f32 %v589, 1.442695
        %v593 = vpow.pop %v592
        %v594 = vmul.f32 %v586, -0.33333334
        %v595 = vmul.f32 %v587, -0.33333334
        %v596 = vmul.f32 %v594, 1.442695
        %v597 = vpow.pop %v596
        %v598 = vmul.f32 %v595, 1.442695
        %v599 = vpow.pop %v598
        %v616 = vrot.slane %v441, 7
        %vm617 = vcmask 1041409
        %v618 = vsel %vm617, %v616, %v440
        %v619 = vrot.slane %v442, 6
        %vm620 = vcmask 1042434
        %v621 = vsel %vm620, %v619, %v618
        %v622 = vrot.slane %v443, 5
        %vm623 = vcmask 1043459
        %v624 = vsel %vm623, %v622, %v621
        %v625 = vrot.slane %v444, 4
        %vm626 = vcmask 1044484
        %v627 = vsel %vm626, %v625, %v624
        %v628 = vrot.slane %v445, 3
        %vm629 = vcmask 1045509
        %v630 = vsel %vm629, %v628, %v627
        %v631 = vrot.slane %v446, 2
        %vm632 = vcmask 1046534
        %v633 = vsel %vm632, %v631, %v630
        %v634 = vrot.slane %v447, 1
        %vm635 = vcmask 1047559
        %v636 = vsel %vm635, %v634, %v633
        %v637 = vrot.slane %v449, 7
        %v638 = vsel %vm617, %v637, %v448
        %v639 = vrot.slane %v450, 6
        %v640 = vsel %vm620, %v639, %v638
        %v641 = vrot.slane %v451, 5
        %v642 = vsel %vm623, %v641, %v640
        %v643 = vrot.slane %v452, 4
        %v644 = vsel %vm626, %v643, %v642
        %v645 = vrot.slane %v453, 3
        %v646 = vsel %vm629, %v645, %v644
        %v647 = vrot.slane %v454, 2
        %v648 = vsel %vm632, %v647, %v646
        %v649 = vrot.slane %v455, 1
        %v650 = vsel %vm635, %v649, %v648
        %651 = vrot.lane.b32.xlu0 %v636, 127
        %v652 = vpop.permute.xlu0 %651
        %653 = vrot.lane.b32.xlu0 %v650, 127
        %v654 = vpop.permute.xlu0 %653
        %v657 = vmul.f32 %v591, %v652
        %v658 = vmul.f32 %v593, %v654
        %v659 = vadd.f32 %v657, 0.0
        %v660 = vadd.f32 %v658, 0.0
        %v661 = vsel %vm280, %v659, 0.0
        %v662 = vsel %vm280, %v660, 0.0
        %v663 = vadd.f32 %v661, %v662
        %v664 = vrot.slane %v663, 4
        %v665 = vadd.f32 %v663, %v664
        %v666 = vrot.slane %v665, 2
        %v667 = vadd.f32 %v665, %v666
        %v668 = vrot.slane %v667, 1
        %v669 = vadd.f32 %v667, %v668
        %v670 = vmul.f32 %v597, %v474
        %v671 = vmul.f32 %v599, %v475
        %v672 = vadd.f32 %v670, 0.0
        %v673 = vadd.f32 %v671, 0.0
        %v674 = vsel %vm280, %v672, 0.0
        %v675 = vsel %vm280, %v673, 0.0
        %v676 = vadd.f32 %v674, %v675
        %v677 = vrot.slane %v676, 4
        %v678 = vadd.f32 %v676, %v677
        %v679 = vrot.slane %v678, 2
        %v680 = vadd.f32 %v678, %v679
        %v681 = vrot.slane %v680, 1
        %v682 = vadd.f32 %v680, %v681
        %vm683 = vcmask 122880
        %684 = vst.msk [vmem:[%s265] sm:$0x1] %vm683, %v289
        %685 = vst.msk [vmem:[%s265 + $0x1] sm:$0x1] %vm683, %v302
        %686 = vst.msk [vmem:[%s265 + $0x2] sm:$0x1] %vm683, %v315
        %687 = vst.msk [vmem:[%s265 + $0x3] sm:$0x1] %vm683, %v669
        %688 = vst.msk [vmem:[%s265 + $0x4] sm:$0x1] %vm683, %v682
        %vm689 = vcmask 124928
        %690 = vst.msk [vmem:[%s265 + $0x5] sm:$0x7] %vm689, 0.0
        %s691 = sand.u32 %s109, 1
        %s692 = scalar_lea.sflag [#allocation4], %s691
        %s693 = sand.u32 %s109, 1
        %s694 = smul.addr %s693, 8
        %s695 = scalar_lea.vmem [#allocation8], %s694
        // Predicated region
        $region45: #{tpu_custom_call.1} parent=31 // pred_check
          %p696 = pneg %p119
        $region46: #{tpu_custom_call.1} parent=31 // pred_check_branch
          %698 = sbr.rel (%p696) target = $region48
        $region47: #{tpu_custom_call.1} parent=31 // pred_region
          %s700 = ssub.s32 128, 128
          %701 = vsyncadd %s692, %s700
          %s702 = smul.addr %s23, 128
          %s703 = scalar_lea.hbm %s3, %s702
          %s705 = sshll.u32 %s695, 4
          %s706 = int_to_ptr.vmem [resolvable:$true] %s705
          %708 = dma.vmem_to_hbm [thread:$0]  %s706, 128, %s703, %s692
        $region48: #{tpu_custom_call.1} parent=31 // pred_fallthru
          _
      $region32: #{tpu_custom_call.1} parent=5 // pred_fallthru
        _
      %p709 = scmp.le.s32.totalorder 2, %s18
      // Predicated region
      $region49: #{tpu_custom_call.1} parent=5 // pred_check
        %p710 = pneg %p709
      $region50: #{tpu_custom_call.1} parent=5 // pred_check_branch
        %712 = sbr.rel (%p710) target = $region52
      $region51: #{tpu_custom_call.1} parent=5 // pred_region
        %s713 = ssub.s32 %s18, 2
        // Predicated region
        $region53: #{tpu_custom_call.1} parent=51 // pred_check
          %p714 = pneg %p125
        $region54: #{tpu_custom_call.1} parent=51 // pred_check_branch
          %716 = sbr.rel (%p714) target = $region56
        $region55: #{tpu_custom_call.1} parent=51 // pred_region
          %s717 = sand.u32 %s110, 1
          %s718 = scalar_lea.sflag [#allocation4], %s717
          %s719 = sand.u32 %s110, 1
          %s720 = smul.addr %s719, 8
          %s721 = scalar_lea.vmem [#allocation8], %s720
          %722 = dma.done %s718, 128
        $region56: #{tpu_custom_call.1} parent=51 // pred_fallthru
          _
      $region52: #{tpu_custom_call.1} parent=5 // pred_fallthru
        _
    $region6: #{tpu_custom_call.1} parent=1 // loop_footer
      %s22 = sadd.s32 1, %s18
    $region7: #{tpu_custom_call.1} parent=1 // loop_footer_branch
      %17 = sbr.rel target = $region3
    $region8: #{tpu_custom_call.1} parent=1 // loop_exit
      _
    %723 = vsyncpa [#allocation3], 1
    %s724 = scalar_lea.sflag [#allocation3], 1
    %725 = vsyncpa %s724, 1
    %726 = vsyncpa [#allocation6], 1
    %s727 = scalar_lea.sflag [#allocation6], 1
    %728 = vsyncpa %s727, 1
    %729 = vsyncpa [#allocation4], 1
    %s730 = scalar_lea.sflag [#allocation4], 1
    %731 = vsyncpa %s730, 1

</llo_original>
